<compile_context>
chip_gen: v7x
topology: tpu7x:2x2x1
jax: 0.10.0
libtpu: 0.0.40
codegen_flags: <defaults>
</compile_context>

<pallas_src>
import functools

import jax
import jax.numpy as jnp
from jax.experimental import pallas as pl
from jax.experimental.pallas import tpu as pltpu

LANE = 128
SUBLANE = 8


def _cdiv(a, b):
    return (a + b - 1) // b


def _round_up(n, m):
    return ((n + m - 1) // m) * m


# --------------------------------------------------------------------------- #
# Kernel
# --------------------------------------------------------------------------- #
def _mlp_kernel(x_ref,
                w_in_ref, b_in_ref,
                w1_ref, b1_ref,
                w2_ref, b2_ref,
                w_out_ref, b_out_ref,
                o_ref):
    relu = lambda v: jnp.maximum(v, 0.0)
    cdt = w_in_ref.dtype  # dtype fed to the MXU (bf16 or f32)

    x = x_ref[...]
    if x.dtype != cdt:
        x = x.astype(cdt)

    # fc_in + ReLU   (f32 accumulation, bias-add / ReLU in f32)
    h = jnp.dot(x, w_in_ref[...], preferred_element_type=jnp.float32) + b_in_ref[...]
    h = relu(h)

    # ResNetBlock (non-conditional, no batchnorm):
    #   _x = relu(fc1(h)); _x = fc2(_x); _x += h; h = relu(_x)
    t = jnp.dot(h.astype(cdt), w1_ref[...], preferred_element_type=jnp.float32) + b1_ref[...]
    t = relu(t)
    t = jnp.dot(t.astype(cdt), w2_ref[...], preferred_element_type=jnp.float32) + b2_ref[...]
    h = relu(t + h)

    # fc_out (native, un-padded output width), last_activation = identity
    y = jnp.dot(h.astype(cdt), w_out_ref[...], preferred_element_type=jnp.float32) + b_out_ref[...]
    o_ref[...] = y.astype(o_ref.dtype)


# --------------------------------------------------------------------------- #
# One-time parameter preparation (pad hid lanes to 128, cast to bf16).
# Call once at init; do NOT re-run per forward call.
# --------------------------------------------------------------------------- #
def prepare_params(params, *, use_bf16=True):
    hid_dim = params["w_in"].shape[1]
    hid_p = _round_up(hid_dim, LANE)           # 64 -> 128 (lane-dense), never more
    dh = hid_p - hid_dim
    wdt = jnp.bfloat16 if use_bf16 else jnp.float32

    return dict(
        w_in=jnp.pad(params["w_in"], ((0, 0), (0, dh))).astype(wdt),
        b_in=jnp.pad(params["b_in"], ((0, 0), (0, dh))).astype(jnp.float32),
        w1=jnp.pad(params["w1"], ((0, dh), (0, dh))).astype(wdt),
        b1=jnp.pad(params["b1"], ((0, 0), (0, dh))).astype(jnp.float32),
        w2=jnp.pad(params["w2"], ((0, dh), (0, dh))).astype(wdt),
        b2=jnp.pad(params["b2"], ((0, 0), (0, dh))).astype(jnp.float32),
        # output kept at native width: only pad the (contracting) hid rows
        w_out=jnp.pad(params["w_out"], ((0, dh), (0, 0))).astype(wdt),
        b_out=params["b_out"].astype(jnp.float32),
    )


def _choose_tile(B, tile_b):
    """Pick a batch tile that (a) minimizes edge waste and (b) gives an even
    number of grid steps when >1 so v7x's two TensorCores split evenly."""
    n_tiles = _cdiv(B, tile_b)
    if n_tiles > 1 and n_tiles % 2 == 1:
        n_tiles += 1
    tile = _round_up(_cdiv(B, n_tiles), SUBLANE)
    return tile


# --------------------------------------------------------------------------- #
# Forward wrapper
# --------------------------------------------------------------------------- #
def mlp_forward(x, prepped, *, tile_b=2048):
    """x: [B, in_dim] float32. prepped: output of prepare_params()."""
    B, in_dim = x.shape
    hid_p = prepped["w_in"].shape[1]
    out_dim = prepped["w_out"].shape[1]

    tile = _choose_tile(B, tile_b)
    n_tiles = _cdiv(B, tile)          # last block may be partial (edge-masked)

    weights = (prepped["w_in"], prepped["b_in"],
               prepped["w1"], prepped["b1"],
               prepped["w2"], prepped["b2"],
               prepped["w_out"], prepped["b_out"])

    # x / output tiles march with the grid; weights keep a constant block
    # index so they are fetched once and stay resident in VMEM.
    x_spec = pl.BlockSpec((tile, in_dim), lambda i: (i, 0))
    w_specs = [pl.BlockSpec(w.shape, lambda i: (0, 0)) for w in weights]
    out_spec = pl.BlockSpec((tile, out_dim), lambda i: (i, 0))

    flops = 2 * B * (in_dim * hid_p + 2 * hid_p * hid_p + hid_p * out_dim)
    bytes_accessed = (
        x.size * x.dtype.itemsize
        + sum(w.size * w.dtype.itemsize for w in weights)
        + B * out_dim * x.dtype.itemsize
    )

    return pl.pallas_call(
        _mlp_kernel,
        out_shape=jax.ShapeDtypeStruct((B, out_dim), x.dtype),
        grid_spec=pltpu.PrefetchScalarGridSpec(
            num_scalar_prefetch=0,
            grid=(n_tiles,),
            in_specs=[x_spec] + w_specs,
            out_specs=out_spec,
        ),
        compiler_params=pltpu.CompilerParams(
            dimension_semantics=("parallel",),
        ),
        cost_estimate=pl.CostEstimate(
            flops=flops, transcendentals=0, bytes_accessed=bytes_accessed),
    )(x, *weights)


# --------------------------------------------------------------------------- #
# Init + pure-JAX reference
# --------------------------------------------------------------------------- #
def init_params(key, in_dim, hid_dim, out_dim):
    """Deterministic synthetic init (uniform, roughly matching nn.Linear scale)."""
    ks = jax.random.split(key, 8)

    def linear(kw, kb, fan_in, fan_out):
        bound = 1.0 / jnp.sqrt(fan_in)
        w = jax.random.uniform(kw, (fan_in, fan_out), jnp.float32, -bound, bound)
        b = jax.random.uniform(kb, (1, fan_out), jnp.float32, -bound, bound)
        return w, b

    w_in, b_in = linear(ks[0], ks[1], in_dim, hid_dim)
    w1, b1 = linear(ks[2], ks[3], hid_dim, hid_dim)   # ResNetBlock.fc1
    w2, b2 = linear(ks[4], ks[5], hid_dim, hid_dim)   # ResNetBlock.fc2
    w_out, b_out = linear(ks[6], ks[7], hid_dim, out_dim)

    return dict(w_in=w_in, b_in=b_in, w1=w1, b1=b1, w2=w2, b2=b2,
                w_out=w_out, b_out=b_out)


def mlp_reference(x, p):
    relu = lambda v: jnp.maximum(v, 0.0)
    h = relu(x @ p["w_in"] + p["b_in"])
    t = relu(h @ p["w1"] + p["b1"])
    t = t @ p["w2"] + p["b2"]
    h = relu(t + h)
    return h @ p["w_out"] + p["b_out"]


# --------------------------------------------------------------------------- #
if __name__ == "__main__":
    B, IN_DIM, HID_DIM, OUT_DIM = 8, 16, 64, 8

    key = jax.random.PRNGKey(0)
    kx, kp, kx2 = jax.random.split(key, 3)
    x = jax.random.normal(kx, (B, IN_DIM), dtype=jnp.float32)
    params = init_params(kp, IN_DIM, HID_DIM, OUT_DIM)

    # Weight prep (pad + cast) is done ONCE, outside the per-call path.
    prepped_f32 = jax.tree_util.tree_map(
        jax.block_until_ready, prepare_params(params, use_bf16=False))
    prepped_bf16 = jax.tree_util.tree_map(
        jax.block_until_ready, prepare_params(params, use_bf16=True))

    fwd = jax.jit(functools.partial(mlp_forward, tile_b=2048))
    fwd_small_tile = jax.jit(functools.partial(mlp_forward, tile_b=256))

    ref = mlp_reference(x, params)

    # f32-MXU path: tight tolerance vs reference.
    out = jax.block_until_ready(fwd(x, prepped_f32))
    assert out.shape == (B, OUT_DIM)
    assert jnp.allclose(out, ref, atol=1e-5, rtol=1e-5)

    # bf16-MXU path (default / fast): looser tolerance (inputs lose mantissa,
    # accumulation stays f32).
    out_bf = jax.block_until_ready(fwd(x, prepped_bf16))
    assert jnp.allclose(out_bf, ref, atol=3e-2, rtol=3e-2)

    # Multi-step grid + partial edge block (600 rows, tile_b=256 -> 4 tiles of
    # 152 rows, last block ragged) -- exercises edge masking & even step count.
    B2 = 600
    x2 = jax.random.normal(kx2, (B2, IN_DIM), dtype=jnp.float32)
    ref2 = mlp_reference(x2, params)

    out2 = jax.block_until_ready(fwd_small_tile(x2, prepped_bf16))
    assert out2.shape == (B2, OUT_DIM)
    assert jnp.allclose(out2, ref2, atol=3e-2, rtol=3e-2)

    # Single big tile over a ragged batch (tile_b=2048 -> one partial block).
    out3 = jax.block_until_ready(fwd(x2, prepped_bf16))
    assert out3.shape == (B2, OUT_DIM)
    assert jnp.allclose(out3, ref2, atol=3e-2, rtol=3e-2)

    print("KERNEL_OK")
</pallas_src>

<mosaic_0001>
module attributes {stable_mosaic.version = 11 : i64} {
  func.func @_mlp_kernel(%arg0: i32, %arg1: memref<8x16xf32, #tpu.memory_space<vmem>>, %arg2: memref<16x128xf32, #tpu.memory_space<vmem>>, %arg3: memref<1x128xf32, #tpu.memory_space<vmem>>, %arg4: memref<128x128xf32, #tpu.memory_space<vmem>>, %arg5: memref<1x128xf32, #tpu.memory_space<vmem>>, %arg6: memref<128x128xf32, #tpu.memory_space<vmem>>, %arg7: memref<1x128xf32, #tpu.memory_space<vmem>>, %arg8: memref<128x8xf32, #tpu.memory_space<vmem>>, %arg9: memref<1x8xf32, #tpu.memory_space<vmem>>, %arg10: memref<8x8xf32, #tpu.memory_space<vmem>>) attributes {dimension_semantics = [#tpu.dimension_semantics<parallel>], iteration_bounds = array<i64: 1>, scalar_prefetch = 0 : i64, scratch_operands = 0 : i64, tpu.core_type = #tpu.core_type<tc>, window_params = [{transform_indices = @transform_0, window_bounds = array<i64: 8, 16>}, {pipeline_mode = #tpu.pipeline_mode<synchronous>, transform_indices = @transform_1, window_bounds = array<i64: 16, 128>}, {pipeline_mode = #tpu.pipeline_mode<synchronous>, transform_indices = @transform_2, window_bounds = array<i64: 1, 128>}, {pipeline_mode = #tpu.pipeline_mode<synchronous>, transform_indices = @transform_3, window_bounds = array<i64: 128, 128>}, {pipeline_mode = #tpu.pipeline_mode<synchronous>, transform_indices = @transform_4, window_bounds = array<i64: 1, 128>}, {pipeline_mode = #tpu.pipeline_mode<synchronous>, transform_indices = @transform_5, window_bounds = array<i64: 128, 128>}, {pipeline_mode = #tpu.pipeline_mode<synchronous>, transform_indices = @transform_6, window_bounds = array<i64: 1, 128>}, {pipeline_mode = #tpu.pipeline_mode<synchronous>, transform_indices = @transform_7, window_bounds = array<i64: 128, 8>}, {pipeline_mode = #tpu.pipeline_mode<synchronous>, transform_indices = @transform_8, window_bounds = array<i64: 1, 8>}, {transform_indices = @transform_9, window_bounds = array<i64: 8, 8>}]} {
    %c0 = arith.constant 0 : index
    %c0_0 = arith.constant 0 : index
    %0 = vector.load %arg1[%c0, %c0_0] : memref<8x16xf32, #tpu.memory_space<vmem>>, vector<8x16xf32>
    %c0_1 = arith.constant 0 : index
    %c0_2 = arith.constant 0 : index
    %1 = vector.load %arg2[%c0_1, %c0_2] : memref<16x128xf32, #tpu.memory_space<vmem>>, vector<16x128xf32>
    %cst = arith.constant dense<0.000000e+00> : vector<8x128xf32>
    %2 = tpu.matmul %0, %1, %cst {dimension_numbers = #tpu.dot_dimension_numbers<[1], [0], [0], [1], [0, 0, 1, 1], [], []>} : vector<8x16xf32>, vector<16x128xf32>, vector<8x128xf32> -> vector<8x128xf32>
    %c0_3 = arith.constant 0 : index
    %c0_4 = arith.constant 0 : index
    %3 = vector.load %arg3[%c0_3, %c0_4] : memref<1x128xf32, #tpu.memory_space<vmem>>, vector<1x128xf32>
    %4 = vector.broadcast %3 : vector<1x128xf32> to vector<8x128xf32>
    %5 = arith.addf %2, %4 : vector<8x128xf32>
    %cst_5 = arith.constant 0.000000e+00 : f32
    %6 = vector.broadcast %cst_5 : f32 to vector<8x128xf32>
    %7 = arith.maximumf %5, %6 : vector<8x128xf32>
    %c0_6 = arith.constant 0 : index
    %c0_7 = arith.constant 0 : index
    %8 = vector.load %arg4[%c0_6, %c0_7] : memref<128x128xf32, #tpu.memory_space<vmem>>, vector<128x128xf32>
    %cst_8 = arith.constant dense<0.000000e+00> : vector<8x128xf32>
    %9 = tpu.matmul %7, %8, %cst_8 {dimension_numbers = #tpu.dot_dimension_numbers<[1], [0], [0], [1], [0, 0, 1, 1], [], []>} : vector<8x128xf32>, vector<128x128xf32>, vector<8x128xf32> -> vector<8x128xf32>
    %c0_9 = arith.constant 0 : index
    %c0_10 = arith.constant 0 : index
    %10 = vector.load %arg5[%c0_9, %c0_10] : memref<1x128xf32, #tpu.memory_space<vmem>>, vector<1x128xf32>
    %11 = vector.broadcast %10 : vector<1x128xf32> to vector<8x128xf32>
    %12 = arith.addf %9, %11 : vector<8x128xf32>
    %cst_11 = arith.constant 0.000000e+00 : f32
    %13 = vector.broadcast %cst_11 : f32 to vector<8x128xf32>
    %14 = arith.maximumf %12, %13 : vector<8x128xf32>
    %c0_12 = arith.constant 0 : index
    %c0_13 = arith.constant 0 : index
    %15 = vector.load %arg6[%c0_12, %c0_13] : memref<128x128xf32, #tpu.memory_space<vmem>>, vector<128x128xf32>
    %cst_14 = arith.constant dense<0.000000e+00> : vector<8x128xf32>
    %16 = tpu.matmul %14, %15, %cst_14 {dimension_numbers = #tpu.dot_dimension_numbers<[1], [0], [0], [1], [0, 0, 1, 1], [], []>} : vector<8x128xf32>, vector<128x128xf32>, vector<8x128xf32> -> vector<8x128xf32>
    %c0_15 = arith.constant 0 : index
    %c0_16 = arith.constant 0 : index
    %17 = vector.load %arg7[%c0_15, %c0_16] : memref<1x128xf32, #tpu.memory_space<vmem>>, vector<1x128xf32>
    %18 = vector.broadcast %17 : vector<1x128xf32> to vector<8x128xf32>
    %19 = arith.addf %16, %18 : vector<8x128xf32>
    %20 = arith.addf %19, %7 : vector<8x128xf32>
    %cst_17 = arith.constant 0.000000e+00 : f32
    %21 = vector.broadcast %cst_17 : f32 to vector<8x128xf32>
    %22 = arith.maximumf %20, %21 : vector<8x128xf32>
    %c0_18 = arith.constant 0 : index
    %c0_19 = arith.constant 0 : index
    %23 = vector.load %arg8[%c0_18, %c0_19] : memref<128x8xf32, #tpu.memory_space<vmem>>, vector<128x8xf32>
    %cst_20 = arith.constant dense<0.000000e+00> : vector<8x8xf32>
    %24 = tpu.matmul %22, %23, %cst_20 {dimension_numbers = #tpu.dot_dimension_numbers<[1], [0], [0], [1], [0, 0, 1, 1], [], []>} : vector<8x128xf32>, vector<128x8xf32>, vector<8x8xf32> -> vector<8x8xf32>
    %c0_21 = arith.constant 0 : index
    %c0_22 = arith.constant 0 : index
    %25 = vector.load %arg9[%c0_21, %c0_22] : memref<1x8xf32, #tpu.memory_space<vmem>>, vector<1x8xf32>
    %26 = vector.broadcast %25 : vector<1x8xf32> to vector<8x8xf32>
    %27 = arith.addf %24, %26 : vector<8x8xf32>
    %c0_23 = arith.constant 0 : index
    %c0_24 = arith.constant 0 : index
    %28 = vector.load %arg10[%c0_23, %c0_24] : memref<8x8xf32, #tpu.memory_space<vmem>>, vector<8x8xf32>
    tpu.vector_store %arg10[%c0_23, %c0_24], %27 {strides = array<i32>} : memref<8x8xf32, #tpu.memory_space<vmem>>, vector<8x8xf32>,
    return
  }
  func.func @transform_0(%arg0: i32) -> (i32, i32) {
    %c0_i32 = arith.constant 0 : i32
    %c0_i32_0 = arith.constant 0 : i32
    return %arg0, %c0_i32 : i32, i32
  }
  func.func @transform_1(%arg0: i32) -> (i32, i32) {
    %c0_i32 = arith.constant 0 : i32
    %c0_i32_0 = arith.constant 0 : i32
    %c0_i32_1 = arith.constant 0 : i32
    return %c0_i32, %c0_i32_0 : i32, i32
  }
  func.func @transform_2(%arg0: i32) -> (i32, i32) {
    %c0_i32 = arith.constant 0 : i32
    %c0_i32_0 = arith.constant 0 : i32
    %c0_i32_1 = arith.constant 0 : i32
    return %c0_i32, %c0_i32_0 : i32, i32
  }
  func.func @transform_3(%arg0: i32) -> (i32, i32) {
    %c0_i32 = arith.constant 0 : i32
    %c0_i32_0 = arith.constant 0 : i32
    %c0_i32_1 = arith.constant 0 : i32
    return %c0_i32, %c0_i32_0 : i32, i32
  }
  func.func @transform_4(%arg0: i32) -> (i32, i32) {
    %c0_i32 = arith.constant 0 : i32
    %c0_i32_0 = arith.constant 0 : i32
    %c0_i32_1 = arith.constant 0 : i32
    return %c0_i32, %c0_i32_0 : i32, i32
  }
  func.func @transform_5(%arg0: i32) -> (i32, i32) {
    %c0_i32 = arith.constant 0 : i32
    %c0_i32_0 = arith.constant 0 : i32
    %c0_i32_1 = arith.constant 0 : i32
    return %c0_i32, %c0_i32_0 : i32, i32
  }
  func.func @transform_6(%arg0: i32) -> (i32, i32) {
    %c0_i32 = arith.constant 0 : i32
    %c0_i32_0 = arith.constant 0 : i32
    %c0_i32_1 = arith.constant 0 : i32
    return %c0_i32, %c0_i32_0 : i32, i32
  }
  func.func @transform_7(%arg0: i32) -> (i32, i32) {
    %c0_i32 = arith.constant 0 : i32
    %c0_i32_0 = arith.constant 0 : i32
    %c0_i32_1 = arith.constant 0 : i32
    return %c0_i32, %c0_i32_0 : i32, i32
  }
  func.func @transform_8(%arg0: i32) -> (i32, i32) {
    %c0_i32 = arith.constant 0 : i32
    %c0_i32_0 = arith.constant 0 : i32
    %c0_i32_1 = arith.constant 0 : i32
    return %c0_i32, %c0_i32_0 : i32, i32
  }
  func.func @transform_9(%arg0: i32) -> (i32, i32) {
    %c0_i32 = arith.constant 0 : i32
    %c0_i32_0 = arith.constant 0 : i32
    return %arg0, %c0_i32 : i32, i32
  }
}

</mosaic_0001>

<llo_original>
// kernel: mlp_forward.1
$region0: #{mlp_forward.1}
  #allocation0 [shape = 'u32[]', space=smem, size = 0x4, offset = 0x4, fixed_abs, tag = 'smem constant byte address 0x4 - core index']
  #allocation1 [shape = 'u32[144,128]{1,0:T(1,128)}', space=vmem, size = 0x12000, scoped, tag = 'internal scratch']
  %s0 = inlined_call_operand.hbm [shape: f32[8,16], index: 0, kind: input, shape index: {}]
  %s1 = inlined_call_operand.vmem [shape: f32[16,128], index: 1, kind: input, shape index: {}]
  %s2 = inlined_call_operand.vmem [shape: f32[1,128], index: 2, kind: input, shape index: {}]
  %s3 = inlined_call_operand.vmem [shape: f32[128,128], index: 3, kind: input, shape index: {}]
  %s4 = inlined_call_operand.vmem [shape: f32[1,128], index: 4, kind: input, shape index: {}]
  %s5 = inlined_call_operand.hbm [shape: f32[128,128], index: 5, kind: input, shape index: {}]
  %s6 = inlined_call_operand.vmem [shape: f32[1,128], index: 6, kind: input, shape index: {}]
  %s7 = inlined_call_operand.vmem [shape: f32[128,8], index: 7, kind: input, shape index: {}]
  %s8 = inlined_call_operand.vmem [shape: f32[1,8], index: 8, kind: input, shape index: {}]
  %s9 = inlined_call_operand.hbm [shape: f32[8,8], index: 9, kind: output, shape index: {}]
  %s10 = sld [smem:[#allocation0]]
  $region54: #{mlp_forward.1} parent=0
    _
  %s12 = ssub.s32 1, %s10
  %s13 = scalar_select 0, %s12, %s10
  $region1: #{mlp_forward.1} parent=0
    #allocation2 [shape = 'u8[4096]{0}', space=vmem, size = 0x1000, scoped, tag = 'input window, operand 0, single buffered']
    #allocation3 [shape = 's32[1]{0}', space=sflag, size = 0x4, scoped, tag = 'scoped memory for mlp_forward.1']
    #allocation4 [shape = 's32[1]{0}', space=sflag, size = 0x4, scoped, tag = 'scoped memory for mlp_forward.1']
    #allocation5 [shape = 'u8[65536]{0}', space=vmem, size = 0x10000, scoped, tag = 'input window, operand 5, single buffered']
    #allocation6 [shape = 's32[1]{0}', space=sflag, size = 0x4, scoped, tag = 'scoped memory for mlp_forward.1']
    #allocation7 [shape = 'u8[4096]{0}', space=vmem, size = 0x1000, scoped, tag = 'output window, operand 0, single buffered']
    %14 = vsyncpa [#allocation3], 0
    %15 = vsyncpa [#allocation6], 0
    %16 = vsyncpa [#allocation4], 0
    // Predicated region
    $region2: #{mlp_forward.1} parent=1 // pred_check
      _
    $region3: #{mlp_forward.1} parent=1 // pred_check_branch
      %18 = sbr.rel (0) target = $region5
    $region4: #{mlp_forward.1} parent=1 // pred_region
      %s20 = ssub.s32 128, 128
      %21 = vsyncadd [#allocation3], %s20
      %s23 = sshll.u32 [#allocation2], 4
      %s24 = int_to_ptr.vmem [resolvable:$true] %s23
      %26 = dma.hbm_to_vmem [thread:$0]  %s0, 128, %s24, [#allocation3]
    $region5: #{mlp_forward.1} parent=1 // pred_fallthru
      _
    // Predicated region
    $region6: #{mlp_forward.1} parent=1 // pred_check
      _
    $region7: #{mlp_forward.1} parent=1 // pred_check_branch
      %28 = sbr.rel (0) target = $region9
    $region8: #{mlp_forward.1} parent=1 // pred_region
      _
    $region9: #{mlp_forward.1} parent=1 // pred_fallthru
      _
    // Predicated region
    $region10: #{mlp_forward.1} parent=1 // pred_check
      _
    $region11: #{mlp_forward.1} parent=1 // pred_check_branch
      %30 = sbr.rel (0) target = $region13
    $region12: #{mlp_forward.1} parent=1 // pred_region
      _
    $region13: #{mlp_forward.1} parent=1 // pred_fallthru
      _
    // Predicated region
    $region14: #{mlp_forward.1} parent=1 // pred_check
      _
    $region15: #{mlp_forward.1} parent=1 // pred_check_branch
      %32 = sbr.rel (0) target = $region17
    $region16: #{mlp_forward.1} parent=1 // pred_region
      _
    $region17: #{mlp_forward.1} parent=1 // pred_fallthru
      _
    // Predicated region
    $region18: #{mlp_forward.1} parent=1 // pred_check
      _
    $region19: #{mlp_forward.1} parent=1 // pred_check_branch
      %34 = sbr.rel (0) target = $region21
    $region20: #{mlp_forward.1} parent=1 // pred_region
      _
    $region21: #{mlp_forward.1} parent=1 // pred_fallthru
      _
    // Predicated region
    $region22: #{mlp_forward.1} parent=1 // pred_check
      _
    $region23: #{mlp_forward.1} parent=1 // pred_check_branch
      %36 = sbr.rel (0) target = $region25
    $region24: #{mlp_forward.1} parent=1 // pred_region
      %s38 = ssub.s32 2048, 2048
      %39 = vsyncadd [#allocation6], %s38
      %s40 = sshll.u32 [#allocation5], 4
      %s41 = int_to_ptr.vmem [resolvable:$true] %s40
      %46 = dma.hbm_to_vmem [thread:$0]  %s5, 2048, %s41, [#allocation6], 128, 128, 8
    $region25: #{mlp_forward.1} parent=1 // pred_fallthru
      _
    // Predicated region
    $region26: #{mlp_forward.1} parent=1 // pred_check
      _
    $region27: #{mlp_forward.1} parent=1 // pred_check_branch
      %48 = sbr.rel (0) target = $region29
    $region28: #{mlp_forward.1} parent=1 // pred_region
      _
    $region29: #{mlp_forward.1} parent=1 // pred_fallthru
      _
    // Predicated region
    $region30: #{mlp_forward.1} parent=1 // pred_check
      _
    $region31: #{mlp_forward.1} parent=1 // pred_check_branch
      %50 = sbr.rel (0) target = $region33
    $region32: #{mlp_forward.1} parent=1 // pred_region
      _
    $region33: #{mlp_forward.1} parent=1 // pred_fallthru
      _
    // Predicated region
    $region34: #{mlp_forward.1} parent=1 // pred_check
      _
    $region35: #{mlp_forward.1} parent=1 // pred_check_branch
      %52 = sbr.rel (0) target = $region37
    $region36: #{mlp_forward.1} parent=1 // pred_region
      _
    $region37: #{mlp_forward.1} parent=1 // pred_fallthru
      _
    // Predicated region
    $region38: #{mlp_forward.1} parent=1 // pred_check
      _
    $region39: #{mlp_forward.1} parent=1 // pred_check_branch
      %54 = sbr.rel (0) target = $region41
    $region40: #{mlp_forward.1} parent=1 // pred_region
      %55 = dma.done [#allocation3], 128
    $region41: #{mlp_forward.1} parent=1 // pred_fallthru
      _
    // Predicated region
    $region42: #{mlp_forward.1} parent=1 // pred_check
      _
    $region43: #{mlp_forward.1} parent=1 // pred_check_branch
      %57 = sbr.rel (0) target = $region45
    $region44: #{mlp_forward.1} parent=1 // pred_region
      %58 = dma.done [#allocation6], 2048
    $region45: #{mlp_forward.1} parent=1 // pred_fallthru
      _
    %v59 = vld [vmem:[#allocation2] sm:$0xff]
    %v60 = vld [vmem:[%s1] sm:$0xff]
    %v61 = vld [vmem:[%s1 + $0x8] sm:$0xff]
    %v62 = vld [vmem:[%s2] sm:$0x1]
    %v64 = vlaneseq
    %v65 = vshrl.u32 %v64, 7
    %v66 = vsub.s32 0, %v65
    %v67 = vrot.slane %v62, %v66
    %vm69 = vcmask 130048
    %v71 = vsel %vm69, %v59, 0
    %73 = vmatprep.subr.mxu0 0.0
    %74 = vmatpush1.msra.mxu0 %v60
    %75 = vmatprep.subr.mxu0 0.0
    %76 = vmatpush1.msra.mxu0 %v61
    %77 = vmatprep.subr.mxu0 0.0
    %78 = vmatpush1.msra.mxu0 0.0
    %79 = vmatprep.subr.mxu0 0.0
    %80 = vmatpush1.msra.mxu0 0.0
    %81 = vmatprep.subr.mxu0 0.0
    %82 = vmatpush1.msra.mxu0 0.0
    %83 = vmatprep.subr.mxu0 0.0
    %84 = vmatpush1.msra.mxu0 0.0
    %85 = vmatprep.subr.mxu0 0.0
    %86 = vmatpush1.msra.mxu0 0.0
    %87 = vmatprep.subr.mxu0 0.0
    %88 = vmatpush1.msra.mxu0 0.0
    %89 = vmatprep.subr.mxu0 0.0
    %90 = vmatpush1.msra.mxu0 0.0
    %91 = vmatprep.subr.mxu0 0.0
    %92 = vmatpush1.msra.mxu0 0.0
    %93 = vmatprep.subr.mxu0 0.0
    %94 = vmatpush1.msra.mxu0 0.0
    %95 = vmatprep.subr.mxu0 0.0
    %96 = vmatpush1.msra.mxu0 0.0
    %97 = vmatprep.subr.mxu0 0.0
    %98 = vmatpush1.msra.mxu0 0.0
    %99 = vmatprep.subr.mxu0 0.0
    %100 = vmatpush1.msra.mxu0 0.0
    %101 = vmatprep.subr.mxu0 0.0
    %102 = vmatpush1.msra.mxu0 0.0
    %103 = vmatprep.subr.mxu0 0.0
    %104 = vmatpush1.msra.mxu0 0.0
    %105 = vmatprep.subr.mxu0 0.0
    %106 = vmatpush1.msra.mxu0 0.0
    %107 = vmatprep.subr.mxu0 0.0
    %108 = vmatpush1.msra.mxu0 0.0
    %109 = vmatprep.subr.mxu0 0.0
    %110 = vmatpush1.msra.mxu0 0.0
    %111 = vmatprep.subr.mxu0 0.0
    %112 = vmatpush1.msra.mxu0 0.0
    %113 = vmatprep.subr.mxu0 0.0
    %114 = vmatpush1.msra.mxu0 0.0
    %115 = vmatprep.subr.mxu0 0.0
    %116 = vmatpush1.msra.mxu0 0.0
    %117 = vmatprep.subr.mxu0 0.0
    %118 = vmatpush1.msra.mxu0 0.0
    %119 = vmatprep.subr.mxu0 0.0
    %120 = vmatpush1.msra.mxu0 0.0
    %121 = vmatprep.subr.mxu0 0.0
    %122 = vmatpush1.msra.mxu0 0.0
    %123 = vmatprep.subr.mxu0 0.0
    %124 = vmatpush1.msra.mxu0 0.0
    %125 = vmatprep.subr.mxu0 0.0
    %126 = vmatpush1.msra.mxu0 0.0
    %127 = vmatprep.subr.mxu0 0.0
    %128 = vmatpush1.msra.mxu0 0.0
    %129 = vmatprep.subr.mxu0 0.0
    %130 = vmatpush1.msra.mxu0 0.0
    %131 = vmatprep.subr.mxu0 0.0
    %132 = vmatpush1.msra.mxu0 0.0
    %133 = vmatprep.subr.mxu0 0.0
    %134 = vmatpush1.msra.mxu0 0.0
    %135 = vmatprep.subr.mxu0 0.0
    %136 = vmatpush1.msra.mxu0 0.0
    %137 = vmatprep.mubr.f32.mxu0 0.0
    %138 = vmatmul.mubr.f32.gmra.mrb[0].mxu0 %v71
    %v139 = vpop.f32.mrb[0].mxu0
    %v140 = vadd.f32 %v67, %v139
    %v141 = vpop.f32.mrb[0].mxu0
    %142 = vdwg.mxu0
    %v143 = vmax.f32 %v140, 0.0
    %v144 = vld [vmem:[%s3] sm:$0xff]
    %v145 = vld [vmem:[%s3 + $0x8] sm:$0xff]
    %v146 = vld [vmem:[%s3 + $0x10] sm:$0xff]
    %v147 = vld [vmem:[%s3 + $0x18] sm:$0xff]
    %v148 = vld [vmem:[%s3 + $0x20] sm:$0xff]
    %v149 = vld [vmem:[%s3 + $0x28] sm:$0xff]
    %v150 = vld [vmem:[%s3 + $0x30] sm:$0xff]
    %v151 = vld [vmem:[%s3 + $0x38] sm:$0xff]
    %v152 = vld [vmem:[%s3 + $0x40] sm:$0xff]
    %v153 = vld [vmem:[%s3 + $0x48] sm:$0xff]
    %v154 = vld [vmem:[%s3 + $0x50] sm:$0xff]
    %v155 = vld [vmem:[%s3 + $0x58] sm:$0xff]
    %v156 = vld [vmem:[%s3 + $0x60] sm:$0xff]
    %v157 = vld [vmem:[%s3 + $0x68] sm:$0xff]
    %v158 = vld [vmem:[%s3 + $0x70] sm:$0xff]
    %v159 = vld [vmem:[%s3 + $0x78] sm:$0xff]
    %v160 = vld [vmem:[%s4] sm:$0x1]
    %v162 = vlaneseq
    %v163 = vshrl.u32 %v162, 7
    %v164 = vsub.s32 0, %v163
    %v165 = vrot.slane %v160, %v164
    %167 = vmatprep.subr.mxu0 0.0
    %168 = vmatpush1.msra.mxu0 %v144
    %169 = vmatprep.subr.mxu0 0.0
    %170 = vmatpush1.msra.mxu0 %v145
    %171 = vmatprep.subr.mxu0 0.0
    %172 = vmatpush1.msra.mxu0 %v146
    %173 = vmatprep.subr.mxu0 0.0
    %174 = vmatpush1.msra.mxu0 %v147
    %175 = vmatprep.subr.mxu0 0.0
    %176 = vmatpush1.msra.mxu0 %v148
    %177 = vmatprep.subr.mxu0 0.0
    %178 = vmatpush1.msra.mxu0 %v149
    %179 = vmatprep.subr.mxu0 0.0
    %180 = vmatpush1.msra.mxu0 %v150
    %181 = vmatprep.subr.mxu0 0.0
    %182 = vmatpush1.msra.mxu0 %v151
    %183 = vmatprep.subr.mxu0 0.0
    %184 = vmatpush1.msra.mxu0 %v152
    %185 = vmatprep.subr.mxu0 0.0
    %186 = vmatpush1.msra.mxu0 %v153
    %187 = vmatprep.subr.mxu0 0.0
    %188 = vmatpush1.msra.mxu0 %v154
    %189 = vmatprep.subr.mxu0 0.0
    %190 = vmatpush1.msra.mxu0 %v155
    %191 = vmatprep.subr.mxu0 0.0
    %192 = vmatpush1.msra.mxu0 %v156
    %193 = vmatprep.subr.mxu0 0.0
    %194 = vmatpush1.msra.mxu0 %v157
    %195 = vmatprep.subr.mxu0 0.0
    %196 = vmatpush1.msra.mxu0 %v158
    %197 = vmatprep.subr.mxu0 0.0
    %198 = vmatpush1.msra.mxu0 %v159
    %199 = vmatprep.subr.mxu0 0.0
    %200 = vmatpush1.msra.mxu0 0.0
    %201 = vmatprep.subr.mxu0 0.0
    %202 = vmatpush1.msra.mxu0 0.0
    %203 = vmatprep.subr.mxu0 0.0
    %204 = vmatpush1.msra.mxu0 0.0
    %205 = vmatprep.subr.mxu0 0.0
    %206 = vmatpush1.msra.mxu0 0.0
    %207 = vmatprep.subr.mxu0 0.0
    %208 = vmatpush1.msra.mxu0 0.0
    %209 = vmatprep.subr.mxu0 0.0
    %210 = vmatpush1.msra.mxu0 0.0
    %211 = vmatprep.subr.mxu0 0.0
    %212 = vmatpush1.msra.mxu0 0.0
    %213 = vmatprep.subr.mxu0 0.0
    %214 = vmatpush1.msra.mxu0 0.0
    %215 = vmatprep.subr.mxu0 0.0
    %216 = vmatpush1.msra.mxu0 0.0
    %217 = vmatprep.subr.mxu0 0.0
    %218 = vmatpush1.msra.mxu0 0.0
    %219 = vmatprep.subr.mxu0 0.0
    %220 = vmatpush1.msra.mxu0 0.0
    %221 = vmatprep.subr.mxu0 0.0
    %222 = vmatpush1.msra.mxu0 0.0
    %223 = vmatprep.subr.mxu0 0.0
    %224 = vmatpush1.msra.mxu0 0.0
    %225 = vmatprep.subr.mxu0 0.0
    %226 = vmatpush1.msra.mxu0 0.0
    %227 = vmatprep.subr.mxu0 0.0
    %228 = vmatpush1.msra.mxu0 0.0
    %229 = vmatprep.subr.mxu0 0.0
    %230 = vmatpush1.msra.mxu0 0.0
    %231 = vmatprep.mubr.f32.mxu0 0.0
    %232 = vmatmul.mubr.f32.gmra.mrb[0].mxu0 %v143
    %v233 = vpop.f32.mrb[0].mxu0
    %v234 = vadd.f32 %v165, %v233
    %v235 = vpop.f32.mrb[0].mxu0
    %236 = vdwg.mxu0
    %v237 = vmax.f32 %v234, 0.0
    %v238 = vld [vmem:[#allocation5] sm:$0xff]
    %v239 = vld [vmem:[#allocation5 + $0x8] sm:$0xff]
    %v240 = vld [vmem:[#allocation5 + $0x10] sm:$0xff]
    %v241 = vld [vmem:[#allocation5 + $0x18] sm:$0xff]
    %v242 = vld [vmem:[#allocation5 + $0x20] sm:$0xff]
    %v243 = vld [vmem:[#allocation5 + $0x28] sm:$0xff]
    %v244 = vld [vmem:[#allocation5 + $0x30] sm:$0xff]
    %v245 = vld [vmem:[#allocation5 + $0x38] sm:$0xff]
    %v246 = vld [vmem:[#allocation5 + $0x40] sm:$0xff]
    %v247 = vld [vmem:[#allocation5 + $0x48] sm:$0xff]
    %v248 = vld [vmem:[#allocation5 + $0x50] sm:$0xff]
    %v249 = vld [vmem:[#allocation5 + $0x58] sm:$0xff]
    %v250 = vld [vmem:[#allocation5 + $0x60] sm:$0xff]
    %v251 = vld [vmem:[#allocation5 + $0x68] sm:$0xff]
    %v252 = vld [vmem:[#allocation5 + $0x70] sm:$0xff]
    %v253 = vld [vmem:[#allocation5 + $0x78] sm:$0xff]
    %v254 = vld [vmem:[%s6] sm:$0x1]
    %v256 = vlaneseq
    %v257 = vshrl.u32 %v256, 7
    %v258 = vsub.s32 0, %v257
    %v259 = vrot.slane %v254, %v258
    %261 = vmatprep.subr.mxu0 0.0
    %262 = vmatpush1.msra.mxu0 %v238
    %263 = vmatprep.subr.mxu0 0.0
    %264 = vmatpush1.msra.mxu0 %v239
    %265 = vmatprep.subr.mxu0 0.0
    %266 = vmatpush1.msra.mxu0 %v240
    %267 = vmatprep.subr.mxu0 0.0
    %268 = vmatpush1.msra.mxu0 %v241
    %269 = vmatprep.subr.mxu0 0.0
    %270 = vmatpush1.msra.mxu0 %v242
    %271 = vmatprep.subr.mxu0 0.0
    %272 = vmatpush1.msra.mxu0 %v243
    %273 = vmatprep.subr.mxu0 0.0
    %274 = vmatpush1.msra.mxu0 %v244
    %275 = vmatprep.subr.mxu0 0.0
    %276 = vmatpush1.msra.mxu0 %v245
    %277 = vmatprep.subr.mxu0 0.0
    %278 = vmatpush1.msra.mxu0 %v246
    %279 = vmatprep.subr.mxu0 0.0
    %280 = vmatpush1.msra.mxu0 %v247
    %281 = vmatprep.subr.mxu0 0.0
    %282 = vmatpush1.msra.mxu0 %v248
    %283 = vmatprep.subr.mxu0 0.0
    %284 = vmatpush1.msra.mxu0 %v249
    %285 = vmatprep.subr.mxu0 0.0
    %286 = vmatpush1.msra.mxu0 %v250
    %287 = vmatprep.subr.mxu0 0.0
    %288 = vmatpush1.msra.mxu0 %v251
    %289 = vmatprep.subr.mxu0 0.0
    %290 = vmatpush1.msra.mxu0 %v252
    %291 = vmatprep.subr.mxu0 0.0
    %292 = vmatpush1.msra.mxu0 %v253
    %293 = vmatprep.subr.mxu0 0.0
    %294 = vmatpush1.msra.mxu0 0.0
    %295 = vmatprep.subr.mxu0 0.0
    %296 = vmatpush1.msra.mxu0 0.0
    %297 = vmatprep.subr.mxu0 0.0
    %298 = vmatpush1.msra.mxu0 0.0
    %299 = vmatprep.subr.mxu0 0.0
    %300 = vmatpush1.msra.mxu0 0.0
    %301 = vmatprep.subr.mxu0 0.0
    %302 = vmatpush1.msra.mxu0 0.0
    %303 = vmatprep.subr.mxu0 0.0
    %304 = vmatpush1.msra.mxu0 0.0
    %305 = vmatprep.subr.mxu0 0.0
    %306 = vmatpush1.msra.mxu0 0.0
    %307 = vmatprep.subr.mxu0 0.0
    %308 = vmatpush1.msra.mxu0 0.0
    %309 = vmatprep.subr.mxu0 0.0
    %310 = vmatpush1.msra.mxu0 0.0
    %311 = vmatprep.subr.mxu0 0.0
    %312 = vmatpush1.msra.mxu0 0.0
    %313 = vmatprep.subr.mxu0 0.0
    %314 = vmatpush1.msra.mxu0 0.0
    %315 = vmatprep.subr.mxu0 0.0
    %316 = vmatpush1.msra.mxu0 0.0
    %317 = vmatprep.subr.mxu0 0.0
    %318 = vmatpush1.msra.mxu0 0.0
    %319 = vmatprep.subr.mxu0 0.0
    %320 = vmatpush1.msra.mxu0 0.0
    %321 = vmatprep.subr.mxu0 0.0
    %322 = vmatpush1.msra.mxu0 0.0
    %323 = vmatprep.subr.mxu0 0.0
    %324 = vmatpush1.msra.mxu0 0.0
    %325 = vmatprep.mubr.f32.mxu0 0.0
    %326 = vmatmul.mubr.f32.gmra.mrb[0].mxu0 %v237
    %v327 = vpop.f32.mrb[0].mxu0
    %v328 = vadd.f32 %v259, %v327
    %v329 = vpop.f32.mrb[0].mxu0
    %330 = vdwg.mxu0
    %v331 = vadd.f32 %v328, %v143
    %v332 = vmax.f32 %v331, 0.0
    %v333 = vld [vmem:[%s7] sm:$0xff]
    %v334 = vld [vmem:[%s7 + $0x8] sm:$0xff]
    %v335 = vld [vmem:[%s7 + $0x10] sm:$0xff]
    %v336 = vld [vmem:[%s7 + $0x18] sm:$0xff]
    %v337 = vld [vmem:[%s7 + $0x20] sm:$0xff]
    %v338 = vld [vmem:[%s7 + $0x28] sm:$0xff]
    %v339 = vld [vmem:[%s7 + $0x30] sm:$0xff]
    %v340 = vld [vmem:[%s7 + $0x38] sm:$0xff]
    %v341 = vld [vmem:[%s7 + $0x40] sm:$0xff]
    %v342 = vld [vmem:[%s7 + $0x48] sm:$0xff]
    %v343 = vld [vmem:[%s7 + $0x50] sm:$0xff]
    %v344 = vld [vmem:[%s7 + $0x58] sm:$0xff]
    %v345 = vld [vmem:[%s7 + $0x60] sm:$0xff]
    %v346 = vld [vmem:[%s7 + $0x68] sm:$0xff]
    %v347 = vld [vmem:[%s7 + $0x70] sm:$0xff]
    %v348 = vld [vmem:[%s7 + $0x78] sm:$0xff]
    %v349 = vld [vmem:[%s8] sm:$0x1]
    %v351 = vlaneseq
    %v352 = vshrl.u32 %v351, 7
    %v353 = vsub.s32 0, %v352
    %v354 = vrot.slane %v349, %v353
    %356 = vmatprep.subr.mxu0 0.0
    %357 = vmatpush1.msra.mxu0 %v333
    %358 = vmatprep.subr.mxu0 0.0
    %359 = vmatpush1.msra.mxu0 %v334
    %360 = vmatprep.subr.mxu0 0.0
    %361 = vmatpush1.msra.mxu0 %v335
    %362 = vmatprep.subr.mxu0 0.0
    %363 = vmatpush1.msra.mxu0 %v336
    %364 = vmatprep.subr.mxu0 0.0
    %365 = vmatpush1.msra.mxu0 %v337
    %366 = vmatprep.subr.mxu0 0.0
    %367 = vmatpush1.msra.mxu0 %v338
    %368 = vmatprep.subr.mxu0 0.0
    %369 = vmatpush1.msra.mxu0 %v339
    %370 = vmatprep.subr.mxu0 0.0
    %371 = vmatpush1.msra.mxu0 %v340
    %372 = vmatprep.subr.mxu0 0.0
    %373 = vmatpush1.msra.mxu0 %v341
    %374 = vmatprep.subr.mxu0 0.0
    %375 = vmatpush1.msra.mxu0 %v342
    %376 = vmatprep.subr.mxu0 0.0
    %377 = vmatpush1.msra.mxu0 %v343
    %378 = vmatprep.subr.mxu0 0.0
    %379 = vmatpush1.msra.mxu0 %v344
    %380 = vmatprep.subr.mxu0 0.0
    %381 = vmatpush1.msra.mxu0 %v345
    %382 = vmatprep.subr.mxu0 0.0
    %383 = vmatpush1.msra.mxu0 %v346
    %384 = vmatprep.subr.mxu0 0.0
    %385 = vmatpush1.msra.mxu0 %v347
    %386 = vmatprep.subr.mxu0 0.0
    %387 = vmatpush1.msra.mxu0 %v348
    %388 = vmatprep.subr.mxu0 0.0
    %389 = vmatpush1.msra.mxu0 0.0
    %390 = vmatprep.subr.mxu0 0.0
    %391 = vmatpush1.msra.mxu0 0.0
    %392 = vmatprep.subr.mxu0 0.0
    %393 = vmatpush1.msra.mxu0 0.0
    %394 = vmatprep.subr.mxu0 0.0
    %395 = vmatpush1.msra.mxu0 0.0
    %396 = vmatprep.subr.mxu0 0.0
    %397 = vmatpush1.msra.mxu0 0.0
    %398 = vmatprep.subr.mxu0 0.0
    %399 = vmatpush1.msra.mxu0 0.0
    %400 = vmatprep.subr.mxu0 0.0
    %401 = vmatpush1.msra.mxu0 0.0
    %402 = vmatprep.subr.mxu0 0.0
    %403 = vmatpush1.msra.mxu0 0.0
    %404 = vmatprep.subr.mxu0 0.0
    %405 = vmatpush1.msra.mxu0 0.0
    %406 = vmatprep.subr.mxu0 0.0
    %407 = vmatpush1.msra.mxu0 0.0
    %408 = vmatprep.subr.mxu0 0.0
    %409 = vmatpush1.msra.mxu0 0.0
    %410 = vmatprep.subr.mxu0 0.0
    %411 = vmatpush1.msra.mxu0 0.0
    %412 = vmatprep.subr.mxu0 0.0
    %413 = vmatpush1.msra.mxu0 0.0
    %414 = vmatprep.subr.mxu0 0.0
    %415 = vmatpush1.msra.mxu0 0.0
    %416 = vmatprep.subr.mxu0 0.0
    %417 = vmatpush1.msra.mxu0 0.0
    %418 = vmatprep.subr.mxu0 0.0
    %419 = vmatpush1.msra.mxu0 0.0
    %420 = vmatprep.mubr.f32.mxu0 0.0
    %421 = vmatmul.mubr.f32.gmra.mrb[0].mxu0 %v332
    %v422 = vpop.f32.mrb[0].mxu0
    %v423 = vadd.f32 %v354, %v422
    %v424 = vpop.f32.mrb[0].mxu0
    %425 = vdwg.mxu0
    %vm426 = vcmask 64512
    %427 = vst.msk [vmem:[#allocation7] sm:$0xff] %vm426, %v423
    // Predicated region
    $region46: #{mlp_forward.1} parent=1 // pred_check
      _
    $region47: #{mlp_forward.1} parent=1 // pred_check_branch
      %429 = sbr.rel (0) target = $region49
    $region48: #{mlp_forward.1} parent=1 // pred_region
      %s431 = ssub.s32 128, 128
      %432 = vsyncadd [#allocation4], %s431
      %s434 = sshll.u32 [#allocation7], 4
      %s435 = int_to_ptr.vmem [resolvable:$true] %s434
      %437 = dma.vmem_to_hbm [thread:$0]  %s435, 128, %s9, [#allocation4]
    $region49: #{mlp_forward.1} parent=1 // pred_fallthru
      _
    // Predicated region
    $region50: #{mlp_forward.1} parent=1 // pred_check
      _
    $region51: #{mlp_forward.1} parent=1 // pred_check_branch
      %439 = sbr.rel (0) target = $region53
    $region52: #{mlp_forward.1} parent=1 // pred_region
      %440 = dma.done [#allocation4], 128
    $region53: #{mlp_forward.1} parent=1 // pred_fallthru
      _
    %441 = vsyncpa [#allocation3], 1
    %442 = vsyncpa [#allocation6], 1
    %443 = vsyncpa [#allocation4], 1

</llo_original>
